<compile_context>
chip_gen: v7x
topology: tpu7x:2x2x1
jax: 0.10.0
libtpu: 0.0.40
codegen_flags: <defaults>
</compile_context>

<pallas_src>
import jax
import jax.numpy as jnp
from jax import lax
from jax.experimental import pallas as pl
from jax.experimental.pallas import tpu as pltpu

IN_FEATURES = 10
OUT_FEATURES = 10
NUM_B = 3            # A.grandchildren_b has 3 B modules (chain length)
NUM_MM = NUM_B + 1   # 3 chained c_linear matmuls + final a_linear


def a_forward_kernel(a_ref, w_ref, b_ref, out_ref):
    """Fused forward for module A (live compute path only).

    a_ref:   (batch, IN)           activations
    w_ref:   (NUM_MM, OUT, IN)     [Wc0, Wc1, Wc2, Wa] in PyTorch (out, in) layout
    b_ref:   (NUM_MM, OUT)         [bc0, bc1, bc2, ba]
    out_ref: (NUM_MM*batch, OUT)   rows [i*batch:(i+1)*batch] = i-th chain value,
                                   last block = a_linear output.
    """
    batch = a_ref.shape[0]
    dn = (((1,), (1,)), ((), ()))        # contract features with weight's `in` dim (= x @ W.T)

    x = a_ref[...]                       # (batch, IN) f32
    # 3 chained c_linear matmuls (unrolled; each with its own weight slice).
    for i in range(NUM_B):
        w = w_ref[i]                     # (OUT, IN)
        b = b_ref[i:i + 1, :]            # (1, OUT) -> broadcasts over batch
        x = lax.dot_general(3.0 * x, w, dimension_numbers=dn,
                            preferred_element_type=jnp.float32) + b
        out_ref[i * batch:(i + 1) * batch, :] = x.astype(out_ref.dtype)

    # Final a_linear.
    w = w_ref[NUM_B]
    b = b_ref[NUM_B:NUM_B + 1, :]
    y = lax.dot_general(x, w, dimension_numbers=dn,
                        preferred_element_type=jnp.float32) + b
    out_ref[NUM_B * batch:NUM_MM * batch, :] = y.astype(out_ref.dtype)


def pack_params(c_weights, c_biases, a_weight, a_bias):
    """One-time (model-load) parameter packing.

    Stacks the three c_linear weights and the a_linear weight into a single
    (NUM_MM, OUT, IN) slab (kept in PyTorch (out, in) layout — no transpose)
    plus a (NUM_MM, OUT) bias slab, so the forward pass emits no per-call
    weight-reshaping ops.
    """
    w_all = jnp.stack(list(c_weights) + [a_weight], axis=0)
    b_all = jnp.stack(list(c_biases) + [a_bias], axis=0)
    return w_all, b_all


def a_forward(a_inputs, w_all, b_all):
    """Mirror of A.forward. Returns ([a_linear(x3)], [([i*a], x_{i+1}) for i in 0..2])."""
    batch = a_inputs.shape[0]
    dtype = a_inputs.dtype

    vmem = pl.BlockSpec(memory_space=pltpu.MemorySpace.VMEM)
    slab = pl.pallas_call(
        a_forward_kernel,
        out_shape=jax.ShapeDtypeStruct((NUM_MM * batch, OUT_FEATURES), dtype),
        in_specs=[vmem, vmem, vmem],
        out_specs=vmem,
    )(a_inputs, w_all, b_all)

    chain = [slab[i * batch:(i + 1) * batch] for i in range(NUM_B)]
    a_out = slab[NUM_B * batch:NUM_MM * batch]

    # output_dict entries: ([i * a_inputs], x_{i+1}.clone()) — trivial wrapper ops.
    output_dict = [([i * a_inputs], chain[i]) for i in range(NUM_B)]
    return ([a_out], output_dict)


def _reference(a_inputs, c_params, a_w, a_b):
    """Pure-JAX mirror of the PyTorch A.forward return value."""
    def lin(x, w, b):
        return x @ w.T + b

    b_out = a_inputs
    output_dict = []
    for i in range(NUM_B):
        w, b = c_params[i]
        # B.forward returns (((((C.y2,),),),),); only y2 propagates.
        b_out = lin(b_out + b_out * 2, w, b)
        output_dict.append(([i * a_inputs], b_out))
    return ([lin(b_out, a_w, a_b)], output_dict)


if __name__ == "__main__":
    key = jax.random.PRNGKey(0)
    keys = jax.random.split(key, 9)

    batch = 8
    a_inputs = jax.random.normal(keys[0], (batch, IN_FEATURES), dtype=jnp.float32)

    # Deterministic synthetic Linear(10, 10) parameters (PyTorch-style init).
    bound = 1.0 / (IN_FEATURES ** 0.5)

    def lin_params(kw, kb):
        w = jax.random.uniform(kw, (OUT_FEATURES, IN_FEATURES),
                               minval=-bound, maxval=bound, dtype=jnp.float32)
        b = jax.random.uniform(kb, (OUT_FEATURES,),
                               minval=-bound, maxval=bound, dtype=jnp.float32)
        return w, b

    # One c_linear per B module; each B's b_linear never affects A's outputs,
    # so those (dead) parameters are not materialized.
    c_params = [lin_params(keys[1 + 2 * i], keys[2 + 2 * i]) for i in range(NUM_B)]
    a_w, a_b = lin_params(keys[7], keys[8])

    # Model-load-time packing (not on the per-call critical path).
    w_all, b_all = pack_params([w for w, _ in c_params],
                               [b for _, b in c_params], a_w, a_b)

    out = a_forward(a_inputs, w_all, b_all)
    jax.block_until_ready(out)

    ref = _reference(a_inputs, c_params, a_w, a_b)

    pairs = [(out[0][0], ref[0][0])]
    for i in range(NUM_B):
        pairs.append((out[1][i][0][0], ref[1][i][0][0]))
        pairs.append((out[1][i][1], ref[1][i][1]))
    for o, r in pairs:
        assert o.shape == r.shape and o.dtype == r.dtype, (o.shape, r.shape, o.dtype, r.dtype)
        assert jnp.allclose(o, r, atol=1e-3, rtol=1e-3), float(jnp.max(jnp.abs(o - r)))

    print("KERNEL_OK")
</pallas_src>

<mosaic_0001>
module attributes {stable_mosaic.version = 11 : i64} {
  func.func @a_forward_kernel(%arg0: memref<8x10xf32, #tpu.memory_space<vmem>>, %arg1: memref<4x10x10xf32, #tpu.memory_space<vmem>>, %arg2: memref<4x10xf32, #tpu.memory_space<vmem>>, %arg3: memref<32x10xf32, #tpu.memory_space<vmem>>) attributes {dimension_semantics = [], scalar_prefetch = 0 : i64, scratch_operands = 0 : i64, tpu.core_type = #tpu.core_type<tc>} {
    %c0 = arith.constant 0 : index
    %c0_0 = arith.constant 0 : index
    %0 = vector.load %arg0[%c0, %c0_0] : memref<8x10xf32, #tpu.memory_space<vmem>>, vector<8x10xf32>
    %c0_1 = arith.constant 0 : index
    %c0_2 = arith.constant 0 : index
    %c0_3 = arith.constant 0 : index
    %1 = vector.load %arg1[%c0_1, %c0_2, %c0_3] : memref<4x10x10xf32, #tpu.memory_space<vmem>>, vector<1x10x10xf32>
    %2 = vector.shape_cast %1 : vector<1x10x10xf32> to vector<10x10xf32>
    %c0_4 = arith.constant 0 : index
    %c0_5 = arith.constant 0 : index
    %3 = vector.load %arg2[%c0_4, %c0_5] : memref<4x10xf32, #tpu.memory_space<vmem>>, vector<1x10xf32>
    %cst = arith.constant 3.000000e+00 : f32
    %4 = vector.broadcast %cst : f32 to vector<8x10xf32>
    %5 = arith.mulf %4, %0 : vector<8x10xf32>
    %cst_6 = arith.constant dense<0.000000e+00> : vector<8x10xf32>
    %6 = tpu.matmul %5, %2, %cst_6 {dimension_numbers = #tpu.dot_dimension_numbers<[1], [1], [0], [0], [0, 0, 1, 0], [], []>} : vector<8x10xf32>, vector<10x10xf32>, vector<8x10xf32> -> vector<8x10xf32>
    %7 = vector.broadcast %3 : vector<1x10xf32> to vector<8x10xf32>
    %8 = arith.addf %6, %7 : vector<8x10xf32>
    %c0_7 = arith.constant 0 : index
    %c0_8 = arith.constant 0 : index
    %9 = vector.load %arg3[%c0_7, %c0_8] : memref<32x10xf32, #tpu.memory_space<vmem>>, vector<8x10xf32>
    tpu.vector_store %arg3[%c0_7, %c0_8], %8 {strides = array<i32>} : memref<32x10xf32, #tpu.memory_space<vmem>>, vector<8x10xf32>,
    %c1 = arith.constant 1 : index
    %c0_9 = arith.constant 0 : index
    %c0_10 = arith.constant 0 : index
    %10 = vector.load %arg1[%c1, %c0_9, %c0_10] : memref<4x10x10xf32, #tpu.memory_space<vmem>>, vector<1x10x10xf32>
    %11 = vector.shape_cast %10 : vector<1x10x10xf32> to vector<10x10xf32>
    %c1_11 = arith.constant 1 : index
    %c0_12 = arith.constant 0 : index
    %12 = vector.load %arg2[%c1_11, %c0_12] : memref<4x10xf32, #tpu.memory_space<vmem>>, vector<1x10xf32>
    %cst_13 = arith.constant 3.000000e+00 : f32
    %13 = vector.broadcast %cst_13 : f32 to vector<8x10xf32>
    %14 = arith.mulf %13, %8 : vector<8x10xf32>
    %cst_14 = arith.constant dense<0.000000e+00> : vector<8x10xf32>
    %15 = tpu.matmul %14, %11, %cst_14 {dimension_numbers = #tpu.dot_dimension_numbers<[1], [1], [0], [0], [0, 0, 1, 0], [], []>} : vector<8x10xf32>, vector<10x10xf32>, vector<8x10xf32> -> vector<8x10xf32>
    %16 = vector.broadcast %12 : vector<1x10xf32> to vector<8x10xf32>
    %17 = arith.addf %15, %16 : vector<8x10xf32>
    %c8 = arith.constant 8 : index
    %c0_15 = arith.constant 0 : index
    %18 = vector.load %arg3[%c8, %c0_15] : memref<32x10xf32, #tpu.memory_space<vmem>>, vector<8x10xf32>
    tpu.vector_store %arg3[%c8, %c0_15], %17 {strides = array<i32>} : memref<32x10xf32, #tpu.memory_space<vmem>>, vector<8x10xf32>,
    %c2 = arith.constant 2 : index
    %c0_16 = arith.constant 0 : index
    %c0_17 = arith.constant 0 : index
    %19 = vector.load %arg1[%c2, %c0_16, %c0_17] : memref<4x10x10xf32, #tpu.memory_space<vmem>>, vector<1x10x10xf32>
    %20 = vector.shape_cast %19 : vector<1x10x10xf32> to vector<10x10xf32>
    %c2_18 = arith.constant 2 : index
    %c0_19 = arith.constant 0 : index
    %21 = vector.load %arg2[%c2_18, %c0_19] : memref<4x10xf32, #tpu.memory_space<vmem>>, vector<1x10xf32>
    %cst_20 = arith.constant 3.000000e+00 : f32
    %22 = vector.broadcast %cst_20 : f32 to vector<8x10xf32>
    %23 = arith.mulf %22, %17 : vector<8x10xf32>
    %cst_21 = arith.constant dense<0.000000e+00> : vector<8x10xf32>
    %24 = tpu.matmul %23, %20, %cst_21 {dimension_numbers = #tpu.dot_dimension_numbers<[1], [1], [0], [0], [0, 0, 1, 0], [], []>} : vector<8x10xf32>, vector<10x10xf32>, vector<8x10xf32> -> vector<8x10xf32>
    %25 = vector.broadcast %21 : vector<1x10xf32> to vector<8x10xf32>
    %26 = arith.addf %24, %25 : vector<8x10xf32>
    %c16 = arith.constant 16 : index
    %c0_22 = arith.constant 0 : index
    %27 = vector.load %arg3[%c16, %c0_22] : memref<32x10xf32, #tpu.memory_space<vmem>>, vector<8x10xf32>
    tpu.vector_store %arg3[%c16, %c0_22], %26 {strides = array<i32>} : memref<32x10xf32, #tpu.memory_space<vmem>>, vector<8x10xf32>,
    %c3 = arith.constant 3 : index
    %c0_23 = arith.constant 0 : index
    %c0_24 = arith.constant 0 : index
    %28 = vector.load %arg1[%c3, %c0_23, %c0_24] : memref<4x10x10xf32, #tpu.memory_space<vmem>>, vector<1x10x10xf32>
    %29 = vector.shape_cast %28 : vector<1x10x10xf32> to vector<10x10xf32>
    %c3_25 = arith.constant 3 : index
    %c0_26 = arith.constant 0 : index
    %30 = vector.load %arg2[%c3_25, %c0_26] : memref<4x10xf32, #tpu.memory_space<vmem>>, vector<1x10xf32>
    %cst_27 = arith.constant dense<0.000000e+00> : vector<8x10xf32>
    %31 = tpu.matmul %26, %29, %cst_27 {dimension_numbers = #tpu.dot_dimension_numbers<[1], [1], [0], [0], [0, 0, 1, 0], [], []>} : vector<8x10xf32>, vector<10x10xf32>, vector<8x10xf32> -> vector<8x10xf32>
    %32 = vector.broadcast %30 : vector<1x10xf32> to vector<8x10xf32>
    %33 = arith.addf %31, %32 : vector<8x10xf32>
    %c24 = arith.constant 24 : index
    %c0_28 = arith.constant 0 : index
    %34 = vector.load %arg3[%c24, %c0_28] : memref<32x10xf32, #tpu.memory_space<vmem>>, vector<8x10xf32>
    tpu.vector_store %arg3[%c24, %c0_28], %33 {strides = array<i32>} : memref<32x10xf32, #tpu.memory_space<vmem>>, vector<8x10xf32>,
    return
  }
}

</mosaic_0001>

<llo_original>
// kernel: tpu_custom_call.1
$region0: #{tpu_custom_call.1}
  #allocation0 [shape = 'u32[]', space=smem, size = 0x4, offset = 0x4, fixed_abs, tag = 'smem constant byte address 0x4 - core index']
  #allocation1 [shape = 'u32[144,128]{1,0:T(1,128)}', space=vmem, size = 0x12000, scoped, tag = 'internal scratch']
  %s0 = inlined_call_operand.vmem [shape: f32[8,10], index: 0, kind: input, shape index: {}]
  %s1 = inlined_call_operand.vmem [shape: f32[4,10,10], index: 1, kind: input, shape index: {}]
  %s2 = inlined_call_operand.vmem [shape: f32[4,10], index: 2, kind: input, shape index: {}]
  %s3 = inlined_call_operand.vmem [shape: f32[32,10], index: 3, kind: output, shape index: {}]
  %s4 = sld [smem:[#allocation0]]
  $region22: #{tpu_custom_call.1} parent=0
    _
  %s6 = ssub.s32 1, %s4
  %s7 = scalar_select 0, %s6, %s4
  // Predicated region
  $region2: #{tpu_custom_call.1} parent=0 // pred_check
    _
  $region3: #{tpu_custom_call.1} parent=0 // pred_check_branch
    %9 = sbr.rel (0) target = $region5
  $region4: #{tpu_custom_call.1} parent=0 // pred_region
    _
  $region5: #{tpu_custom_call.1} parent=0 // pred_fallthru
    _
  // Predicated region
  $region6: #{tpu_custom_call.1} parent=0 // pred_check
    _
  $region7: #{tpu_custom_call.1} parent=0 // pred_check_branch
    %11 = sbr.rel (0) target = $region9
  $region8: #{tpu_custom_call.1} parent=0 // pred_region
    _
  $region9: #{tpu_custom_call.1} parent=0 // pred_fallthru
    _
  // Predicated region
  $region10: #{tpu_custom_call.1} parent=0 // pred_check
    _
  $region11: #{tpu_custom_call.1} parent=0 // pred_check_branch
    %13 = sbr.rel (0) target = $region13
  $region12: #{tpu_custom_call.1} parent=0 // pred_region
    _
  $region13: #{tpu_custom_call.1} parent=0 // pred_fallthru
    _
  %v14 = vld [vmem:[%s0] sm:$0xff]
  %v15 = vld [vmem:[%s1] sm:$0xff]
  %v16 = vld [vmem:[%s1 + $0x8] sm:$0x3]
  %v17 = vld [vmem:[%s2] sm:$0x1]
  %v18 = vmul.f32 %v14, 3.0
  %v19 = vlaneseq
  %v20 = vshrl.u32 %v19, 7
  %v21 = vsub.s32 0, %v20
  %v22 = vrot.slane %v17, %v21
  %vm23 = vcmask 80896
  %v25 = vsel %vm23, %v18, 0
  %v28 = vsel %vm23, %v15, 0
  %v31 = vsel %vm23, %v16, 0
  %33 = vmatprep.subr.mxu0 0.0
  %34 = vmatpush1.xpose.msra.mxu0 %v28
  %35 = vmatprep.subr.mxu0 0.0
  %36 = vmatpush1.xpose.msra.mxu0 %v31
  %37 = vmatprep.subr.mxu0 0.0
  %38 = vmatpush1.xpose.msra.mxu0 0.0
  %39 = vmatprep.subr.mxu0 0.0
  %40 = vmatpush1.xpose.msra.mxu0 0.0
  %41 = vmatprep.subr.mxu0 0.0
  %42 = vmatpush1.xpose.msra.mxu0 0.0
  %43 = vmatprep.subr.mxu0 0.0
  %44 = vmatpush1.xpose.msra.mxu0 0.0
  %45 = vmatprep.subr.mxu0 0.0
  %46 = vmatpush1.xpose.msra.mxu0 0.0
  %47 = vmatprep.subr.mxu0 0.0
  %48 = vmatpush1.xpose.msra.mxu0 0.0
  %49 = vmatprep.subr.mxu0 0.0
  %50 = vmatpush1.xpose.msra.mxu0 0.0
  %51 = vmatprep.subr.mxu0 0.0
  %52 = vmatpush1.xpose.msra.mxu0 0.0
  %53 = vmatprep.subr.mxu0 0.0
  %54 = vmatpush1.xpose.msra.mxu0 0.0
  %55 = vmatprep.subr.mxu0 0.0
  %56 = vmatpush1.xpose.msra.mxu0 0.0
  %57 = vmatprep.subr.mxu0 0.0
  %58 = vmatpush1.xpose.msra.mxu0 0.0
  %59 = vmatprep.subr.mxu0 0.0
  %60 = vmatpush1.xpose.msra.mxu0 0.0
  %61 = vmatprep.subr.mxu0 0.0
  %62 = vmatpush1.xpose.msra.mxu0 0.0
  %63 = vmatprep.subr.mxu0 0.0
  %64 = vmatpush1.xpose.msra.mxu0 0.0
  %65 = vmatprep.subr.mxu0 0.0
  %66 = vmatpush1.xpose.msra.mxu0 0.0
  %67 = vmatprep.subr.mxu0 0.0
  %68 = vmatpush1.xpose.msra.mxu0 0.0
  %69 = vmatprep.subr.mxu0 0.0
  %70 = vmatpush1.xpose.msra.mxu0 0.0
  %71 = vmatprep.subr.mxu0 0.0
  %72 = vmatpush1.xpose.msra.mxu0 0.0
  %73 = vmatprep.subr.mxu0 0.0
  %74 = vmatpush1.xpose.msra.mxu0 0.0
  %75 = vmatprep.subr.mxu0 0.0
  %76 = vmatpush1.xpose.msra.mxu0 0.0
  %77 = vmatprep.subr.mxu0 0.0
  %78 = vmatpush1.xpose.msra.mxu0 0.0
  %79 = vmatprep.subr.mxu0 0.0
  %80 = vmatpush1.xpose.msra.mxu0 0.0
  %81 = vmatprep.subr.mxu0 0.0
  %82 = vmatpush1.xpose.msra.mxu0 0.0
  %83 = vmatprep.subr.mxu0 0.0
  %84 = vmatpush1.xpose.msra.mxu0 0.0
  %85 = vmatprep.subr.mxu0 0.0
  %86 = vmatpush1.xpose.msra.mxu0 0.0
  %87 = vmatprep.subr.mxu0 0.0
  %88 = vmatpush1.xpose.msra.mxu0 0.0
  %89 = vmatprep.subr.mxu0 0.0
  %90 = vmatpush1.xpose.msra.mxu0 0.0
  %91 = vmatprep.subr.mxu0 0.0
  %92 = vmatpush1.xpose.msra.mxu0 0.0
  %93 = vmatprep.subr.mxu0 0.0
  %94 = vmatpush1.xpose.msra.mxu0 0.0
  %95 = vmatprep.subr.mxu0 0.0
  %96 = vmatpush1.xpose.msra.mxu0 0.0
  %97 = vmatprep.mubr.f32.mxu0 0.0
  %98 = vmatmul.mubr.f32.gmra.mrb[0].mxu0 %v25
  %v99 = vpop.f32.mrb[0].mxu0
  %v100 = vadd.f32 %v22, %v99
  %v101 = vpop.f32.mrb[0].mxu0
  %102 = vdwg.mxu0
  %103 = vst.msk [vmem:[%s3] sm:$0xff] %vm23, %v100
  %s104 = scalar_lea.vmem %s1, 16
  %v105 = vld [vmem:[%s104] sm:$0xff]
  %v106 = vld [vmem:[%s104 + $0x8] sm:$0x3]
  %v107 = vld [vmem:[%s2 + $0x1] sm:$0x1]
  %v108 = vmul.f32 %v100, 3.0
  %v109 = vlaneseq
  %v110 = vshrl.u32 %v109, 7
  %v111 = vsub.s32 0, %v110
  %v112 = vrot.slane %v107, %v111
  %v114 = vsel %vm23, %v108, 0
  %v117 = vsel %vm23, %v105, 0
  %v120 = vsel %vm23, %v106, 0
  %122 = vmatprep.subr.mxu0 0.0
  %123 = vmatpush1.xpose.msra.mxu0 %v117
  %124 = vmatprep.subr.mxu0 0.0
  %125 = vmatpush1.xpose.msra.mxu0 %v120
  %126 = vmatprep.subr.mxu0 0.0
  %127 = vmatpush1.xpose.msra.mxu0 0.0
  %128 = vmatprep.subr.mxu0 0.0
  %129 = vmatpush1.xpose.msra.mxu0 0.0
  %130 = vmatprep.subr.mxu0 0.0
  %131 = vmatpush1.xpose.msra.mxu0 0.0
  %132 = vmatprep.subr.mxu0 0.0
  %133 = vmatpush1.xpose.msra.mxu0 0.0
  %134 = vmatprep.subr.mxu0 0.0
  %135 = vmatpush1.xpose.msra.mxu0 0.0
  %136 = vmatprep.subr.mxu0 0.0
  %137 = vmatpush1.xpose.msra.mxu0 0.0
  %138 = vmatprep.subr.mxu0 0.0
  %139 = vmatpush1.xpose.msra.mxu0 0.0
  %140 = vmatprep.subr.mxu0 0.0
  %141 = vmatpush1.xpose.msra.mxu0 0.0
  %142 = vmatprep.subr.mxu0 0.0
  %143 = vmatpush1.xpose.msra.mxu0 0.0
  %144 = vmatprep.subr.mxu0 0.0
  %145 = vmatpush1.xpose.msra.mxu0 0.0
  %146 = vmatprep.subr.mxu0 0.0
  %147 = vmatpush1.xpose.msra.mxu0 0.0
  %148 = vmatprep.subr.mxu0 0.0
  %149 = vmatpush1.xpose.msra.mxu0 0.0
  %150 = vmatprep.subr.mxu0 0.0
  %151 = vmatpush1.xpose.msra.mxu0 0.0
  %152 = vmatprep.subr.mxu0 0.0
  %153 = vmatpush1.xpose.msra.mxu0 0.0
  %154 = vmatprep.subr.mxu0 0.0
  %155 = vmatpush1.xpose.msra.mxu0 0.0
  %156 = vmatprep.subr.mxu0 0.0
  %157 = vmatpush1.xpose.msra.mxu0 0.0
  %158 = vmatprep.subr.mxu0 0.0
  %159 = vmatpush1.xpose.msra.mxu0 0.0
  %160 = vmatprep.subr.mxu0 0.0
  %161 = vmatpush1.xpose.msra.mxu0 0.0
  %162 = vmatprep.subr.mxu0 0.0
  %163 = vmatpush1.xpose.msra.mxu0 0.0
  %164 = vmatprep.subr.mxu0 0.0
  %165 = vmatpush1.xpose.msra.mxu0 0.0
  %166 = vmatprep.subr.mxu0 0.0
  %167 = vmatpush1.xpose.msra.mxu0 0.0
  %168 = vmatprep.subr.mxu0 0.0
  %169 = vmatpush1.xpose.msra.mxu0 0.0
  %170 = vmatprep.subr.mxu0 0.0
  %171 = vmatpush1.xpose.msra.mxu0 0.0
  %172 = vmatprep.subr.mxu0 0.0
  %173 = vmatpush1.xpose.msra.mxu0 0.0
  %174 = vmatprep.subr.mxu0 0.0
  %175 = vmatpush1.xpose.msra.mxu0 0.0
  %176 = vmatprep.subr.mxu0 0.0
  %177 = vmatpush1.xpose.msra.mxu0 0.0
  %178 = vmatprep.subr.mxu0 0.0
  %179 = vmatpush1.xpose.msra.mxu0 0.0
  %180 = vmatprep.subr.mxu0 0.0
  %181 = vmatpush1.xpose.msra.mxu0 0.0
  %182 = vmatprep.subr.mxu0 0.0
  %183 = vmatpush1.xpose.msra.mxu0 0.0
  %184 = vmatprep.subr.mxu0 0.0
  %185 = vmatpush1.xpose.msra.mxu0 0.0
  %186 = vmatprep.mubr.f32.mxu0 0.0
  %187 = vmatmul.mubr.f32.gmra.mrb[0].mxu0 %v114
  %v188 = vpop.f32.mrb[0].mxu0
  %v189 = vadd.f32 %v112, %v188
  %v190 = vpop.f32.mrb[0].mxu0
  %191 = vdwg.mxu0
  %192 = vst.msk [vmem:[%s3 + $0x8] sm:$0xff] %vm23, %v189
  %s193 = scalar_lea.vmem %s1, 32
  %v194 = vld [vmem:[%s193] sm:$0xff]
  %v195 = vld [vmem:[%s193 + $0x8] sm:$0x3]
  %v196 = vld [vmem:[%s2 + $0x2] sm:$0x1]
  %v197 = vmul.f32 %v189, 3.0
  %v198 = vlaneseq
  %v199 = vshrl.u32 %v198, 7
  %v200 = vsub.s32 0, %v199
  %v201 = vrot.slane %v196, %v200
  %v203 = vsel %vm23, %v197, 0
  %v206 = vsel %vm23, %v194, 0
  %v209 = vsel %vm23, %v195, 0
  %211 = vmatprep.subr.mxu0 0.0
  %212 = vmatpush1.xpose.msra.mxu0 %v206
  %213 = vmatprep.subr.mxu0 0.0
  %214 = vmatpush1.xpose.msra.mxu0 %v209
  %215 = vmatprep.subr.mxu0 0.0
  %216 = vmatpush1.xpose.msra.mxu0 0.0
  %217 = vmatprep.subr.mxu0 0.0
  %218 = vmatpush1.xpose.msra.mxu0 0.0
  %219 = vmatprep.subr.mxu0 0.0
  %220 = vmatpush1.xpose.msra.mxu0 0.0
  %221 = vmatprep.subr.mxu0 0.0
  %222 = vmatpush1.xpose.msra.mxu0 0.0
  %223 = vmatprep.subr.mxu0 0.0
  %224 = vmatpush1.xpose.msra.mxu0 0.0
  %225 = vmatprep.subr.mxu0 0.0
  %226 = vmatpush1.xpose.msra.mxu0 0.0
  %227 = vmatprep.subr.mxu0 0.0
  %228 = vmatpush1.xpose.msra.mxu0 0.0
  %229 = vmatprep.subr.mxu0 0.0
  %230 = vmatpush1.xpose.msra.mxu0 0.0
  %231 = vmatprep.subr.mxu0 0.0
  %232 = vmatpush1.xpose.msra.mxu0 0.0
  %233 = vmatprep.subr.mxu0 0.0
  %234 = vmatpush1.xpose.msra.mxu0 0.0
  %235 = vmatprep.subr.mxu0 0.0
  %236 = vmatpush1.xpose.msra.mxu0 0.0
  %237 = vmatprep.subr.mxu0 0.0
  %238 = vmatpush1.xpose.msra.mxu0 0.0
  %239 = vmatprep.subr.mxu0 0.0
  %240 = vmatpush1.xpose.msra.mxu0 0.0
  %241 = vmatprep.subr.mxu0 0.0
  %242 = vmatpush1.xpose.msra.mxu0 0.0
  %243 = vmatprep.subr.mxu0 0.0
  %244 = vmatpush1.xpose.msra.mxu0 0.0
  %245 = vmatprep.subr.mxu0 0.0
  %246 = vmatpush1.xpose.msra.mxu0 0.0
  %247 = vmatprep.subr.mxu0 0.0
  %248 = vmatpush1.xpose.msra.mxu0 0.0
  %249 = vmatprep.subr.mxu0 0.0
  %250 = vmatpush1.xpose.msra.mxu0 0.0
  %251 = vmatprep.subr.mxu0 0.0
  %252 = vmatpush1.xpose.msra.mxu0 0.0
  %253 = vmatprep.subr.mxu0 0.0
  %254 = vmatpush1.xpose.msra.mxu0 0.0
  %255 = vmatprep.subr.mxu0 0.0
  %256 = vmatpush1.xpose.msra.mxu0 0.0
  %257 = vmatprep.subr.mxu0 0.0
  %258 = vmatpush1.xpose.msra.mxu0 0.0
  %259 = vmatprep.subr.mxu0 0.0
  %260 = vmatpush1.xpose.msra.mxu0 0.0
  %261 = vmatprep.subr.mxu0 0.0
  %262 = vmatpush1.xpose.msra.mxu0 0.0
  %263 = vmatprep.subr.mxu0 0.0
  %264 = vmatpush1.xpose.msra.mxu0 0.0
  %265 = vmatprep.subr.mxu0 0.0
  %266 = vmatpush1.xpose.msra.mxu0 0.0
  %267 = vmatprep.subr.mxu0 0.0
  %268 = vmatpush1.xpose.msra.mxu0 0.0
  %269 = vmatprep.subr.mxu0 0.0
  %270 = vmatpush1.xpose.msra.mxu0 0.0
  %271 = vmatprep.subr.mxu0 0.0
  %272 = vmatpush1.xpose.msra.mxu0 0.0
  %273 = vmatprep.subr.mxu0 0.0
  %274 = vmatpush1.xpose.msra.mxu0 0.0
  %275 = vmatprep.mubr.f32.mxu0 0.0
  %276 = vmatmul.mubr.f32.gmra.mrb[0].mxu0 %v203
  %v277 = vpop.f32.mrb[0].mxu0
  %v278 = vadd.f32 %v201, %v277
  %v279 = vpop.f32.mrb[0].mxu0
  %280 = vdwg.mxu0
  %281 = vst.msk [vmem:[%s3 + $0x10] sm:$0xff] %vm23, %v278
  %s282 = scalar_lea.vmem %s1, 48
  %v283 = vld [vmem:[%s282] sm:$0xff]
  %v284 = vld [vmem:[%s282 + $0x8] sm:$0x3]
  %v285 = vld [vmem:[%s2 + $0x3] sm:$0x1]
  %v286 = vlaneseq
  %v287 = vshrl.u32 %v286, 7
  %v288 = vsub.s32 0, %v287
  %v289 = vrot.slane %v285, %v288
  %v291 = vsel %vm23, %v278, 0
  %v294 = vsel %vm23, %v283, 0
  %v297 = vsel %vm23, %v284, 0
  %299 = vmatprep.subr.mxu0 0.0
  %300 = vmatpush1.xpose.msra.mxu0 %v294
  %301 = vmatprep.subr.mxu0 0.0
  %302 = vmatpush1.xpose.msra.mxu0 %v297
  %303 = vmatprep.subr.mxu0 0.0
  %304 = vmatpush1.xpose.msra.mxu0 0.0
  %305 = vmatprep.subr.mxu0 0.0
  %306 = vmatpush1.xpose.msra.mxu0 0.0
  %307 = vmatprep.subr.mxu0 0.0
  %308 = vmatpush1.xpose.msra.mxu0 0.0
  %309 = vmatprep.subr.mxu0 0.0
  %310 = vmatpush1.xpose.msra.mxu0 0.0
  %311 = vmatprep.subr.mxu0 0.0
  %312 = vmatpush1.xpose.msra.mxu0 0.0
  %313 = vmatprep.subr.mxu0 0.0
  %314 = vmatpush1.xpose.msra.mxu0 0.0
  %315 = vmatprep.subr.mxu0 0.0
  %316 = vmatpush1.xpose.msra.mxu0 0.0
  %317 = vmatprep.subr.mxu0 0.0
  %318 = vmatpush1.xpose.msra.mxu0 0.0
  %319 = vmatprep.subr.mxu0 0.0
  %320 = vmatpush1.xpose.msra.mxu0 0.0
  %321 = vmatprep.subr.mxu0 0.0
  %322 = vmatpush1.xpose.msra.mxu0 0.0
  %323 = vmatprep.subr.mxu0 0.0
  %324 = vmatpush1.xpose.msra.mxu0 0.0
  %325 = vmatprep.subr.mxu0 0.0
  %326 = vmatpush1.xpose.msra.mxu0 0.0
  %327 = vmatprep.subr.mxu0 0.0
  %328 = vmatpush1.xpose.msra.mxu0 0.0
  %329 = vmatprep.subr.mxu0 0.0
  %330 = vmatpush1.xpose.msra.mxu0 0.0
  %331 = vmatprep.subr.mxu0 0.0
  %332 = vmatpush1.xpose.msra.mxu0 0.0
  %333 = vmatprep.subr.mxu0 0.0
  %334 = vmatpush1.xpose.msra.mxu0 0.0
  %335 = vmatprep.subr.mxu0 0.0
  %336 = vmatpush1.xpose.msra.mxu0 0.0
  %337 = vmatprep.subr.mxu0 0.0
  %338 = vmatpush1.xpose.msra.mxu0 0.0
  %339 = vmatprep.subr.mxu0 0.0
  %340 = vmatpush1.xpose.msra.mxu0 0.0
  %341 = vmatprep.subr.mxu0 0.0
  %342 = vmatpush1.xpose.msra.mxu0 0.0
  %343 = vmatprep.subr.mxu0 0.0
  %344 = vmatpush1.xpose.msra.mxu0 0.0
  %345 = vmatprep.subr.mxu0 0.0
  %346 = vmatpush1.xpose.msra.mxu0 0.0
  %347 = vmatprep.subr.mxu0 0.0
  %348 = vmatpush1.xpose.msra.mxu0 0.0
  %349 = vmatprep.subr.mxu0 0.0
  %350 = vmatpush1.xpose.msra.mxu0 0.0
  %351 = vmatprep.subr.mxu0 0.0
  %352 = vmatpush1.xpose.msra.mxu0 0.0
  %353 = vmatprep.subr.mxu0 0.0
  %354 = vmatpush1.xpose.msra.mxu0 0.0
  %355 = vmatprep.subr.mxu0 0.0
  %356 = vmatpush1.xpose.msra.mxu0 0.0
  %357 = vmatprep.subr.mxu0 0.0
  %358 = vmatpush1.xpose.msra.mxu0 0.0
  %359 = vmatprep.subr.mxu0 0.0
  %360 = vmatpush1.xpose.msra.mxu0 0.0
  %361 = vmatprep.subr.mxu0 0.0
  %362 = vmatpush1.xpose.msra.mxu0 0.0
  %363 = vmatprep.mubr.f32.mxu0 0.0
  %364 = vmatmul.mubr.f32.gmra.mrb[0].mxu0 %v291
  %v365 = vpop.f32.mrb[0].mxu0
  %v366 = vadd.f32 %v289, %v365
  %v367 = vpop.f32.mrb[0].mxu0
  %368 = vdwg.mxu0
  %369 = vst.msk [vmem:[%s3 + $0x18] sm:$0xff] %vm23, %v366
  // Predicated region
  $region14: #{tpu_custom_call.1} parent=0 // pred_check
    _
  $region15: #{tpu_custom_call.1} parent=0 // pred_check_branch
    %371 = sbr.rel (0) target = $region17
  $region16: #{tpu_custom_call.1} parent=0 // pred_region
    _
  $region17: #{tpu_custom_call.1} parent=0 // pred_fallthru
    _
  // Predicated region
  $region18: #{tpu_custom_call.1} parent=0 // pred_check
    _
  $region19: #{tpu_custom_call.1} parent=0 // pred_check_branch
    %373 = sbr.rel (0) target = $region21
  $region20: #{tpu_custom_call.1} parent=0 // pred_region
    _
  $region21: #{tpu_custom_call.1} parent=0 // pred_fallthru
    _

</llo_original>
